<compile_context>
chip_gen: v6e
topology: v6e:2x2x1
jax: 0.10.0
libtpu: 0.0.40
codegen_flags: <defaults>
</compile_context>

<pallas_src>
import functools

import jax
import jax.numpy as jnp
from jax.experimental import pallas as pl
from jax.experimental.pallas import tpu as pltpu

_EPS = 1e-12  # torch.nn.functional.normalize default eps


def _min_disc_kernel(fg_ref, fd_ref, w_ref, b_ref, out_ref):
    # ReLU on the concatenated features == ReLU applied to each half.
    fg = jnp.maximum(fg_ref[...], 0.0).astype(jnp.float32)   # (block_b, H)
    fd = jnp.maximum(fd_ref[...], 0.0).astype(jnp.float32)   # (block_b, H)
    # Resident (2, H) weight tile: sublane slices are free (no lane shifts).
    wg = w_ref[0:1, :].astype(jnp.float32)                   # (1, H)
    wd = w_ref[1:2, :].astype(jnp.float32)                   # (1, H)
    prod = fg * wg + fd * wd                                  # (block_b, H), VPU

    # For large H (e.g. the module's default 1024), pre-reduce the lane axis
    # with 128-aligned static slices (cheap VPU adds) so the XLU transpose is
    # only (block_b, 128) instead of (block_b, H).
    H = prod.shape[-1]
    if H > 128 and H % 128 == 0:
        acc128 = prod[:, 0:128]
        for s in range(128, H, 128):
            acc128 = acc128 + prod[:, s:s + 128]
        prod = acc128

    # XLU transpose puts the batch on the lane axis; reducing the feature
    # (sublane) axis yields a lane-dense (1, block_b) row directly.
    acc = jnp.sum(prod.T, axis=0, keepdims=True)              # (1, block_b) f32
    acc = acc + b_ref[0]                                      # scalar bias (SMEM)
    # F.normalize(h, p=2, dim=1) with a length-1 dim: h / max(|h|, eps).
    y = acc / jnp.maximum(jnp.abs(acc), _EPS)
    out_ref[...] = y.astype(out_ref.dtype)


def _num_tensorcores_per_chip():
    """2 TensorCores per chip on v7x, 1 on v5e/v6e.  Defensive default: 1."""
    try:
        kind = jax.devices()[0].device_kind.lower()
        if "v7" in kind:
            return 2
    except Exception:  # pragma: no cover - device query should not fail
        pass
    return 1


def _pick_block_b(B, H, num_tc):
    """Batch tile that (a) keeps the (1, block_b) output block lane-legal
    (block_b % 128 == 0 or block_b == B), (b) fits the double-buffered input
    working set in ~12 MiB (under every generation's scoped-VMEM default),
    and (c) gives one step per TensorCore when the chip has two."""
    per_row = 2 * 2 * H * 4                      # 2 inputs x 2 buffers x f32
    cap = max(128, (12 * 1024 * 1024) // max(per_row, 1))
    # One lane-legal step per TensorCore (v7x): needs B divisible by 128*num_tc.
    if num_tc > 1 and B % (128 * num_tc) == 0 and (B // num_tc) <= cap:
        return B // num_tc
    # Single full-B step (v5e/v6e, or small B): block == full dim is always legal.
    if B <= cap:
        return B
    # Otherwise: largest multiple of 128 that divides B and fits the budget.
    bb = (cap // 128) * 128
    while bb >= 128:
        if B % bb == 0:
            return bb
        bb -= 128
    return B  # fallback: full-dim block is always a legal block shape


@functools.partial(jax.jit, static_argnames=("block_b",))
def ufd_min_discriminator(f_g, f_d, weight, bias, *, block_b=None):
    """f_g, f_d: (B, H); weight: (1, 2H) (PyTorch layout); bias: (1,).
    Returns (B, 1) matching the module's forward."""
    B, H = f_g.shape
    assert f_d.shape == (B, H)
    assert weight.shape == (1, 2 * H)
    if block_b is None:
        block_b = _pick_block_b(B, H, _num_tensorcores_per_chip())
    assert B % block_b == 0, (B, block_b)
    assert block_b == B or block_b % 128 == 0, (B, block_b)  # lane-dense output
    num_blocks = B // block_b

    # One-time wrapper-side layout plumbing: (1, 2H) -> (2, H) so the kernel
    # indexes the two halves along the sublane axis instead of slicing lanes.
    w2 = weight.reshape(2, H)
    bias_smem = bias.reshape(1).astype(jnp.float32)

    out_row = pl.pallas_call(
        _min_disc_kernel,
        out_shape=jax.ShapeDtypeStruct((1, B), f_g.dtype),
        grid_spec=pltpu.PrefetchScalarGridSpec(
            num_scalar_prefetch=0,
            grid=(num_blocks,),
            in_specs=[
                pl.BlockSpec((block_b, H), lambda i: (i, 0)),        # f_g tile
                pl.BlockSpec((block_b, H), lambda i: (i, 0)),        # f_d tile
                pl.BlockSpec((2, H), lambda i: (0, 0)),              # weight (resident)
                pl.BlockSpec(memory_space=pltpu.MemorySpace.SMEM),   # bias scalar
            ],
            out_specs=pl.BlockSpec((1, block_b), lambda i: (0, i)),  # lane-dense row
        ),
        compiler_params=pltpu.CompilerParams(
            dimension_semantics=("parallel",),
        ),
    )(f_g, f_d, w2, bias_smem)
    return out_row.reshape(B, 1)


if __name__ == "__main__":
    # Small shapes consistent with the module (hidden_l shrunk from 1024 -> 32).
    # batch=256 keeps the (1, block_b) output block lane-legal on every chip:
    # single 256-row step on v5e/v6e, two 128-row parallel steps on v7x.
    hidden_l = 32
    batch = 256
    initrange = 0.1

    key = jax.random.PRNGKey(0)
    k_fg, k_fd, k_w = jax.random.split(key, 3)

    f_g = jax.random.normal(k_fg, (batch, hidden_l), dtype=jnp.float32)
    f_d = jax.random.normal(k_fd, (batch, hidden_l), dtype=jnp.float32)

    # Deterministic parameter init mirroring the module's __init__:
    #   l0.weight ~ U(-initrange, initrange), shape (1, 2*hidden_l); l0.bias = 0.
    weight = jax.random.uniform(
        k_w, (1, 2 * hidden_l), minval=-initrange, maxval=initrange,
        dtype=jnp.float32)
    bias = jnp.zeros((1,), dtype=jnp.float32)

    out = ufd_min_discriminator(f_g, f_d, weight, bias)
    out = jax.block_until_ready(out)

    # Plain-JAX reference of the module forward (cat -> relu -> linear -> L2 normalize).
    h = jnp.concatenate([f_g, f_d], axis=1)
    h = jnp.maximum(h, 0.0) @ weight.T + bias                      # (B, 1)
    norm = jnp.sqrt(jnp.sum(h * h, axis=1, keepdims=True))
    ref = h / jnp.maximum(norm, _EPS)

    assert out.shape == (batch, 1)
    assert jnp.allclose(out, ref, atol=1e-5, rtol=1e-5), float(
        jnp.max(jnp.abs(out - ref)))

    print("KERNEL_OK")
</pallas_src>

<mosaic_0001>
module attributes {stable_mosaic.version = 11 : i64} {
  func.func @_min_disc_kernel(%arg0: i32, %arg1: memref<256x32xf32, #tpu.memory_space<vmem>>, %arg2: memref<256x32xf32, #tpu.memory_space<vmem>>, %arg3: memref<2x32xf32, #tpu.memory_space<vmem>>, %arg4: memref<1xf32, #tpu.memory_space<smem>>, %arg5: memref<1x256xf32, #tpu.memory_space<vmem>>) attributes {dimension_semantics = [#tpu.dimension_semantics<parallel>], iteration_bounds = array<i64: 1>, scalar_prefetch = 0 : i64, scratch_operands = 0 : i64, tpu.core_type = #tpu.core_type<tc>, window_params = [{transform_indices = @transform_0, window_bounds = array<i64: 256, 32>}, {transform_indices = @transform_1, window_bounds = array<i64: 256, 32>}, {pipeline_mode = #tpu.pipeline_mode<synchronous>, transform_indices = @transform_2, window_bounds = array<i64: 2, 32>}, {transform_indices = @transform_3, window_bounds = array<i64: 1>}, {transform_indices = @transform_4, window_bounds = array<i64: 1, 256>}]} {
    %c0 = arith.constant 0 : index
    %c0_0 = arith.constant 0 : index
    %0 = vector.load %arg1[%c0, %c0_0] : memref<256x32xf32, #tpu.memory_space<vmem>>, vector<256x32xf32>
    %cst = arith.constant 0.000000e+00 : f32
    %1 = vector.broadcast %cst : f32 to vector<256x32xf32>
    %2 = arith.maximumf %0, %1 : vector<256x32xf32>
    %c0_1 = arith.constant 0 : index
    %c0_2 = arith.constant 0 : index
    %3 = vector.load %arg2[%c0_1, %c0_2] : memref<256x32xf32, #tpu.memory_space<vmem>>, vector<256x32xf32>
    %cst_3 = arith.constant 0.000000e+00 : f32
    %4 = vector.broadcast %cst_3 : f32 to vector<256x32xf32>
    %5 = arith.maximumf %3, %4 : vector<256x32xf32>
    %c0_4 = arith.constant 0 : index
    %c0_5 = arith.constant 0 : index
    %6 = vector.load %arg3[%c0_4, %c0_5] : memref<2x32xf32, #tpu.memory_space<vmem>>, vector<1x32xf32>
    %c1 = arith.constant 1 : index
    %c0_6 = arith.constant 0 : index
    %7 = vector.load %arg3[%c1, %c0_6] : memref<2x32xf32, #tpu.memory_space<vmem>>, vector<1x32xf32>
    %8 = vector.broadcast %6 : vector<1x32xf32> to vector<256x32xf32>
    %9 = arith.mulf %2, %8 : vector<256x32xf32>
    %10 = vector.broadcast %7 : vector<1x32xf32> to vector<256x32xf32>
    %11 = arith.mulf %5, %10 : vector<256x32xf32>
    %12 = arith.addf %9, %11 : vector<256x32xf32>
    %13 = tpu.transpose %12, [1, 0] : vector<256x32xf32> -> vector<32x256xf32>
    %cst_7 = arith.constant dense<0.000000e+00> : vector<256xf32>
    %14 = vector.multi_reduction <add>, %13, %cst_7 [0] : vector<32x256xf32> to vector<256xf32>
    %15 = vector.shape_cast %14 : vector<256xf32> to vector<1x256xf32>
    %c0_8 = arith.constant 0 : index
    %16 = memref.load %arg4[%c0_8] : memref<1xf32, #tpu.memory_space<smem>>
    %17 = vector.broadcast %16 : f32 to vector<1x256xf32>
    %18 = arith.addf %15, %17 : vector<1x256xf32>
    %19 = math.absf %18 : vector<1x256xf32>
    %cst_9 = arith.constant 9.99999996E-13 : f32
    %20 = vector.broadcast %cst_9 : f32 to vector<1x256xf32>
    %21 = arith.maximumf %19, %20 : vector<1x256xf32>
    %22 = arith.divf %18, %21 : vector<1x256xf32>
    %c0_10 = arith.constant 0 : index
    %c0_11 = arith.constant 0 : index
    %23 = vector.load %arg5[%c0_10, %c0_11] : memref<1x256xf32, #tpu.memory_space<vmem>>, vector<1x256xf32>
    tpu.vector_store %arg5[%c0_10, %c0_11], %22 {strides = array<i32>} : memref<1x256xf32, #tpu.memory_space<vmem>>, vector<1x256xf32>,
    return
  }
  func.func @transform_0(%arg0: i32) -> (i32, i32) {
    %c0_i32 = arith.constant 0 : i32
    %c0_i32_0 = arith.constant 0 : i32
    return %arg0, %c0_i32 : i32, i32
  }
  func.func @transform_1(%arg0: i32) -> (i32, i32) {
    %c0_i32 = arith.constant 0 : i32
    %c0_i32_0 = arith.constant 0 : i32
    return %arg0, %c0_i32 : i32, i32
  }
  func.func @transform_2(%arg0: i32) -> (i32, i32) {
    %c0_i32 = arith.constant 0 : i32
    %c0_i32_0 = arith.constant 0 : i32
    %c0_i32_1 = arith.constant 0 : i32
    return %c0_i32, %c0_i32_0 : i32, i32
  }
  func.func @transform_3(%arg0: i32) -> i32 {
    %c0_i32 = arith.constant 0 : i32
    %c0_i32_0 = arith.constant 0 : i32
    return %c0_i32 : i32
  }
  func.func @transform_4(%arg0: i32) -> (i32, i32) {
    %c0_i32 = arith.constant 0 : i32
    %c0_i32_0 = arith.constant 0 : i32
    return %c0_i32, %arg0 : i32, i32
  }
}

</mosaic_0001>

<llo_original>
// kernel: ufd_min_discriminator.1
$region0: #{ufd_min_discriminator.1}
  #allocation0 [shape = 'u32[]', space=smem, size = 0x4, offset = 0x4, fixed_abs, tag = 'smem constant byte address 0x4 - core index']
  #allocation1 [shape = 'u32[144,128]{1,0:T(1,128)}', space=vmem, size = 0x12000, scoped, tag = 'internal scratch']
  #allocation2 [shape = 'f32[1]{0:T(128)S(6)}', space=smem, size = 0x200, scoped, tag = 'scoped memory for ufd_min_discriminator.1']
  %s0 = inlined_call_operand.vmem [shape: f32[256,32], index: 0, kind: input, shape index: {}]
  %s1 = inlined_call_operand.vmem [shape: f32[256,32], index: 1, kind: input, shape index: {}]
  %s2 = inlined_call_operand.vmem [shape: f32[2,32], index: 2, kind: input, shape index: {}]
  %s3 = inlined_call_operand.<no memory space> [shape: f32[1], index: 3, kind: input, shape index: {}]
  %s4 = inlined_call_operand.hbm [shape: f32[1,256], index: 4, kind: output, shape index: {}]
  %s5 = sld [smem:[#allocation0]]
  $region26: #{ufd_min_discriminator.1} parent=0
    _
  %s7 = ssub.s32 1, %s5
  %s8 = scalar_select 0, %s7, %s5
  %9 = sst [smem:[#allocation2]] %s3
  $region1: #{ufd_min_discriminator.1} parent=0
    #allocation3 [shape = 'u8[1024]{0}', space=vmem, size = 0x400, scoped, tag = 'output window, operand 0, single buffered']
    #allocation4 [shape = 's32[1]{0}', space=sflag, size = 0x4, scoped, tag = 'scoped memory for ufd_min_discriminator.1']
    %10 = vsyncpa [#allocation4], 0
    // Predicated region
    $region2: #{ufd_min_discriminator.1} parent=1 // pred_check
      _
    $region3: #{ufd_min_discriminator.1} parent=1 // pred_check_branch
      %12 = sbr.rel (0) target = $region5
    $region4: #{ufd_min_discriminator.1} parent=1 // pred_region
      _
    $region5: #{ufd_min_discriminator.1} parent=1 // pred_fallthru
      _
    // Predicated region
    $region6: #{ufd_min_discriminator.1} parent=1 // pred_check
      _
    $region7: #{ufd_min_discriminator.1} parent=1 // pred_check_branch
      %14 = sbr.rel (0) target = $region9
    $region8: #{ufd_min_discriminator.1} parent=1 // pred_region
      _
    $region9: #{ufd_min_discriminator.1} parent=1 // pred_fallthru
      _
    // Predicated region
    $region10: #{ufd_min_discriminator.1} parent=1 // pred_check
      _
    $region11: #{ufd_min_discriminator.1} parent=1 // pred_check_branch
      %16 = sbr.rel (0) target = $region13
    $region12: #{ufd_min_discriminator.1} parent=1 // pred_region
      _
    $region13: #{ufd_min_discriminator.1} parent=1 // pred_fallthru
      _
    // Predicated region
    $region14: #{ufd_min_discriminator.1} parent=1 // pred_check
      _
    $region15: #{ufd_min_discriminator.1} parent=1 // pred_check_branch
      %18 = sbr.rel (0) target = $region17
    $region16: #{ufd_min_discriminator.1} parent=1 // pred_region
      _
    $region17: #{ufd_min_discriminator.1} parent=1 // pred_fallthru
      _
    %v19 = vld [vmem:[%s0] sm:$0xff]
    %v20 = vld [vmem:[%s0 + $0x8] sm:$0xff]
    %v21 = vld [vmem:[%s0 + $0x10] sm:$0xff]
    %v22 = vld [vmem:[%s0 + $0x18] sm:$0xff]
    %v23 = vld [vmem:[%s0 + $0x20] sm:$0xff]
    %v24 = vld [vmem:[%s0 + $0x28] sm:$0xff]
    %v25 = vld [vmem:[%s0 + $0x30] sm:$0xff]
    %v26 = vld [vmem:[%s0 + $0x38] sm:$0xff]
    %v27 = vld [vmem:[%s0 + $0x40] sm:$0xff]
    %v28 = vld [vmem:[%s0 + $0x48] sm:$0xff]
    %v29 = vld [vmem:[%s0 + $0x50] sm:$0xff]
    %v30 = vld [vmem:[%s0 + $0x58] sm:$0xff]
    %v31 = vld [vmem:[%s0 + $0x60] sm:$0xff]
    %v32 = vld [vmem:[%s0 + $0x68] sm:$0xff]
    %v33 = vld [vmem:[%s0 + $0x70] sm:$0xff]
    %v34 = vld [vmem:[%s0 + $0x78] sm:$0xff]
    %v35 = vld [vmem:[%s0 + $0x80] sm:$0xff]
    %v36 = vld [vmem:[%s0 + $0x88] sm:$0xff]
    %v37 = vld [vmem:[%s0 + $0x90] sm:$0xff]
    %v38 = vld [vmem:[%s0 + $0x98] sm:$0xff]
    %v39 = vld [vmem:[%s0 + $0xa0] sm:$0xff]
    %v40 = vld [vmem:[%s0 + $0xa8] sm:$0xff]
    %v41 = vld [vmem:[%s0 + $0xb0] sm:$0xff]
    %v42 = vld [vmem:[%s0 + $0xb8] sm:$0xff]
    %v43 = vld [vmem:[%s0 + $0xc0] sm:$0xff]
    %v44 = vld [vmem:[%s0 + $0xc8] sm:$0xff]
    %v45 = vld [vmem:[%s0 + $0xd0] sm:$0xff]
    %v46 = vld [vmem:[%s0 + $0xd8] sm:$0xff]
    %v47 = vld [vmem:[%s0 + $0xe0] sm:$0xff]
    %v48 = vld [vmem:[%s0 + $0xe8] sm:$0xff]
    %v49 = vld [vmem:[%s0 + $0xf0] sm:$0xff]
    %v50 = vld [vmem:[%s0 + $0xf8] sm:$0xff]
    %v51 = vmax.f32 %v19, 0.0
    %v52 = vmax.f32 %v20, 0.0
    %v53 = vmax.f32 %v21, 0.0
    %v54 = vmax.f32 %v22, 0.0
    %v55 = vmax.f32 %v23, 0.0
    %v56 = vmax.f32 %v24, 0.0
    %v57 = vmax.f32 %v25, 0.0
    %v58 = vmax.f32 %v26, 0.0
    %v59 = vmax.f32 %v27, 0.0
    %v60 = vmax.f32 %v28, 0.0
    %v61 = vmax.f32 %v29, 0.0
    %v62 = vmax.f32 %v30, 0.0
    %v63 = vmax.f32 %v31, 0.0
    %v64 = vmax.f32 %v32, 0.0
    %v65 = vmax.f32 %v33, 0.0
    %v66 = vmax.f32 %v34, 0.0
    %v67 = vmax.f32 %v35, 0.0
    %v68 = vmax.f32 %v36, 0.0
    %v69 = vmax.f32 %v37, 0.0
    %v70 = vmax.f32 %v38, 0.0
    %v71 = vmax.f32 %v39, 0.0
    %v72 = vmax.f32 %v40, 0.0
    %v73 = vmax.f32 %v41, 0.0
    %v74 = vmax.f32 %v42, 0.0
    %v75 = vmax.f32 %v43, 0.0
    %v76 = vmax.f32 %v44, 0.0
    %v77 = vmax.f32 %v45, 0.0
    %v78 = vmax.f32 %v46, 0.0
    %v79 = vmax.f32 %v47, 0.0
    %v80 = vmax.f32 %v48, 0.0
    %v81 = vmax.f32 %v49, 0.0
    %v82 = vmax.f32 %v50, 0.0
    %v83 = vld [vmem:[%s1] sm:$0xff]
    %v84 = vld [vmem:[%s1 + $0x8] sm:$0xff]
    %v85 = vld [vmem:[%s1 + $0x10] sm:$0xff]
    %v86 = vld [vmem:[%s1 + $0x18] sm:$0xff]
    %v87 = vld [vmem:[%s1 + $0x20] sm:$0xff]
    %v88 = vld [vmem:[%s1 + $0x28] sm:$0xff]
    %v89 = vld [vmem:[%s1 + $0x30] sm:$0xff]
    %v90 = vld [vmem:[%s1 + $0x38] sm:$0xff]
    %v91 = vld [vmem:[%s1 + $0x40] sm:$0xff]
    %v92 = vld [vmem:[%s1 + $0x48] sm:$0xff]
    %v93 = vld [vmem:[%s1 + $0x50] sm:$0xff]
    %v94 = vld [vmem:[%s1 + $0x58] sm:$0xff]
    %v95 = vld [vmem:[%s1 + $0x60] sm:$0xff]
    %v96 = vld [vmem:[%s1 + $0x68] sm:$0xff]
    %v97 = vld [vmem:[%s1 + $0x70] sm:$0xff]
    %v98 = vld [vmem:[%s1 + $0x78] sm:$0xff]
    %v99 = vld [vmem:[%s1 + $0x80] sm:$0xff]
    %v100 = vld [vmem:[%s1 + $0x88] sm:$0xff]
    %v101 = vld [vmem:[%s1 + $0x90] sm:$0xff]
    %v102 = vld [vmem:[%s1 + $0x98] sm:$0xff]
    %v103 = vld [vmem:[%s1 + $0xa0] sm:$0xff]
    %v104 = vld [vmem:[%s1 + $0xa8] sm:$0xff]
    %v105 = vld [vmem:[%s1 + $0xb0] sm:$0xff]
    %v106 = vld [vmem:[%s1 + $0xb8] sm:$0xff]
    %v107 = vld [vmem:[%s1 + $0xc0] sm:$0xff]
    %v108 = vld [vmem:[%s1 + $0xc8] sm:$0xff]
    %v109 = vld [vmem:[%s1 + $0xd0] sm:$0xff]
    %v110 = vld [vmem:[%s1 + $0xd8] sm:$0xff]
    %v111 = vld [vmem:[%s1 + $0xe0] sm:$0xff]
    %v112 = vld [vmem:[%s1 + $0xe8] sm:$0xff]
    %v113 = vld [vmem:[%s1 + $0xf0] sm:$0xff]
    %v114 = vld [vmem:[%s1 + $0xf8] sm:$0xff]
    %v115 = vmax.f32 %v83, 0.0
    %v116 = vmax.f32 %v84, 0.0
    %v117 = vmax.f32 %v85, 0.0
    %v118 = vmax.f32 %v86, 0.0
    %v119 = vmax.f32 %v87, 0.0
    %v120 = vmax.f32 %v88, 0.0
    %v121 = vmax.f32 %v89, 0.0
    %v122 = vmax.f32 %v90, 0.0
    %v123 = vmax.f32 %v91, 0.0
    %v124 = vmax.f32 %v92, 0.0
    %v125 = vmax.f32 %v93, 0.0
    %v126 = vmax.f32 %v94, 0.0
    %v127 = vmax.f32 %v95, 0.0
    %v128 = vmax.f32 %v96, 0.0
    %v129 = vmax.f32 %v97, 0.0
    %v130 = vmax.f32 %v98, 0.0
    %v131 = vmax.f32 %v99, 0.0
    %v132 = vmax.f32 %v100, 0.0
    %v133 = vmax.f32 %v101, 0.0
    %v134 = vmax.f32 %v102, 0.0
    %v135 = vmax.f32 %v103, 0.0
    %v136 = vmax.f32 %v104, 0.0
    %v137 = vmax.f32 %v105, 0.0
    %v138 = vmax.f32 %v106, 0.0
    %v139 = vmax.f32 %v107, 0.0
    %v140 = vmax.f32 %v108, 0.0
    %v141 = vmax.f32 %v109, 0.0
    %v142 = vmax.f32 %v110, 0.0
    %v143 = vmax.f32 %v111, 0.0
    %v144 = vmax.f32 %v112, 0.0
    %v145 = vmax.f32 %v113, 0.0
    %v146 = vmax.f32 %v114, 0.0
    %v147 = vld [vmem:[%s2] sm:$0x1]
    %v148 = vld [vmem:[%s2 + $0x1] sm:$0x1]
    %v149 = vlaneseq
    %v150 = vshrl.u32 %v149, 7
    %v151 = vsub.s32 0, %v150
    %v152 = vrot.slane %v147, %v151
    %v153 = vmul.f32 %v51, %v152
    %v154 = vmul.f32 %v52, %v152
    %v155 = vmul.f32 %v53, %v152
    %v156 = vmul.f32 %v54, %v152
    %v157 = vmul.f32 %v55, %v152
    %v158 = vmul.f32 %v56, %v152
    %v159 = vmul.f32 %v57, %v152
    %v160 = vmul.f32 %v58, %v152
    %v161 = vmul.f32 %v59, %v152
    %v162 = vmul.f32 %v60, %v152
    %v163 = vmul.f32 %v61, %v152
    %v164 = vmul.f32 %v62, %v152
    %v165 = vmul.f32 %v63, %v152
    %v166 = vmul.f32 %v64, %v152
    %v167 = vmul.f32 %v65, %v152
    %v168 = vmul.f32 %v66, %v152
    %v169 = vmul.f32 %v67, %v152
    %v170 = vmul.f32 %v68, %v152
    %v171 = vmul.f32 %v69, %v152
    %v172 = vmul.f32 %v70, %v152
    %v173 = vmul.f32 %v71, %v152
    %v174 = vmul.f32 %v72, %v152
    %v175 = vmul.f32 %v73, %v152
    %v176 = vmul.f32 %v74, %v152
    %v177 = vmul.f32 %v75, %v152
    %v178 = vmul.f32 %v76, %v152
    %v179 = vmul.f32 %v77, %v152
    %v180 = vmul.f32 %v78, %v152
    %v181 = vmul.f32 %v79, %v152
    %v182 = vmul.f32 %v80, %v152
    %v183 = vmul.f32 %v81, %v152
    %v184 = vmul.f32 %v82, %v152
    %v185 = vlaneseq
    %v186 = vshrl.u32 %v185, 7
    %v187 = vsub.s32 0, %v186
    %v188 = vrot.slane %v148, %v187
    %v189 = vmul.f32 %v115, %v188
    %v190 = vmul.f32 %v116, %v188
    %v191 = vmul.f32 %v117, %v188
    %v192 = vmul.f32 %v118, %v188
    %v193 = vmul.f32 %v119, %v188
    %v194 = vmul.f32 %v120, %v188
    %v195 = vmul.f32 %v121, %v188
    %v196 = vmul.f32 %v122, %v188
    %v197 = vmul.f32 %v123, %v188
    %v198 = vmul.f32 %v124, %v188
    %v199 = vmul.f32 %v125, %v188
    %v200 = vmul.f32 %v126, %v188
    %v201 = vmul.f32 %v127, %v188
    %v202 = vmul.f32 %v128, %v188
    %v203 = vmul.f32 %v129, %v188
    %v204 = vmul.f32 %v130, %v188
    %v205 = vmul.f32 %v131, %v188
    %v206 = vmul.f32 %v132, %v188
    %v207 = vmul.f32 %v133, %v188
    %v208 = vmul.f32 %v134, %v188
    %v209 = vmul.f32 %v135, %v188
    %v210 = vmul.f32 %v136, %v188
    %v211 = vmul.f32 %v137, %v188
    %v212 = vmul.f32 %v138, %v188
    %v213 = vmul.f32 %v139, %v188
    %v214 = vmul.f32 %v140, %v188
    %v215 = vmul.f32 %v141, %v188
    %v216 = vmul.f32 %v142, %v188
    %v217 = vmul.f32 %v143, %v188
    %v218 = vmul.f32 %v144, %v188
    %v219 = vmul.f32 %v145, %v188
    %v220 = vmul.f32 %v146, %v188
    %v221 = vadd.f32 %v153, %v189
    %v222 = vadd.f32 %v154, %v190
    %v223 = vadd.f32 %v155, %v191
    %v224 = vadd.f32 %v156, %v192
    %v225 = vadd.f32 %v157, %v193
    %v226 = vadd.f32 %v158, %v194
    %v227 = vadd.f32 %v159, %v195
    %v228 = vadd.f32 %v160, %v196
    %v229 = vadd.f32 %v161, %v197
    %v230 = vadd.f32 %v162, %v198
    %v231 = vadd.f32 %v163, %v199
    %v232 = vadd.f32 %v164, %v200
    %v233 = vadd.f32 %v165, %v201
    %v234 = vadd.f32 %v166, %v202
    %v235 = vadd.f32 %v167, %v203
    %v236 = vadd.f32 %v168, %v204
    %v237 = vadd.f32 %v169, %v205
    %v238 = vadd.f32 %v170, %v206
    %v239 = vadd.f32 %v171, %v207
    %v240 = vadd.f32 %v172, %v208
    %v241 = vadd.f32 %v173, %v209
    %v242 = vadd.f32 %v174, %v210
    %v243 = vadd.f32 %v175, %v211
    %v244 = vadd.f32 %v176, %v212
    %v245 = vadd.f32 %v177, %v213
    %v246 = vadd.f32 %v178, %v214
    %v247 = vadd.f32 %v179, %v215
    %v248 = vadd.f32 %v180, %v216
    %v249 = vadd.f32 %v181, %v217
    %v250 = vadd.f32 %v182, %v218
    %v251 = vadd.f32 %v183, %v219
    %v252 = vadd.f32 %v184, %v220
    %253 = vxpose.xlu0.b32.start [1/16] %v221, 128
    %254 = vxpose.xlu0.b32.cont [2/16] %v222, 128
    %255 = vxpose.xlu0.b32.cont [3/16] %v223, 128
    %256 = vxpose.xlu0.b32.cont [4/16] %v224, 128
    %257 = vxpose.xlu0.b32.cont [5/16] %v225, 128
    %258 = vxpose.xlu0.b32.cont [6/16] %v226, 128
    %259 = vxpose.xlu0.b32.cont [7/16] %v227, 128
    %260 = vxpose.xlu0.b32.cont [8/16] %v228, 128
    %261 = vxpose.xlu0.b32.cont [9/16] %v229, 128
    %262 = vxpose.xlu0.b32.cont [10/16] %v230, 128
    %263 = vxpose.xlu0.b32.cont [11/16] %v231, 128
    %264 = vxpose.xlu0.b32.cont [12/16] %v232, 128
    %265 = vxpose.xlu0.b32.cont [13/16] %v233, 128
    %266 = vxpose.xlu0.b32.cont [14/16] %v234, 128
    %267 = vxpose.xlu0.b32.cont [15/16] %v235, 128
    %268 = vxpose.xlu0.b32.end [16/16] %v236, 128
    %v269 = vpop.trf.xlu0
    %v270 = vpop.trf.xlu0
    %v271 = vpop.trf.xlu0
    %v272 = vpop.trf.xlu0
    %v273 = vpop.trf.xlu0
    %v274 = vpop.trf.xlu0
    %v275 = vpop.trf.xlu0
    %v276 = vpop.trf.xlu0
    %v277 = vpop.trf.xlu0
    %v278 = vpop.trf.xlu0
    %v279 = vpop.trf.xlu0
    %v280 = vpop.trf.xlu0
    %v281 = vpop.trf.xlu0
    %v282 = vpop.trf.xlu0
    %v283 = vpop.trf.xlu0
    %v284 = vpop.trf.xlu0
    %285 = vxpose.xlu0.b32.start [1/16] %v237, 128
    %286 = vxpose.xlu0.b32.cont [2/16] %v238, 128
    %287 = vxpose.xlu0.b32.cont [3/16] %v239, 128
    %288 = vxpose.xlu0.b32.cont [4/16] %v240, 128
    %289 = vxpose.xlu0.b32.cont [5/16] %v241, 128
    %290 = vxpose.xlu0.b32.cont [6/16] %v242, 128
    %291 = vxpose.xlu0.b32.cont [7/16] %v243, 128
    %292 = vxpose.xlu0.b32.cont [8/16] %v244, 128
    %293 = vxpose.xlu0.b32.cont [9/16] %v245, 128
    %294 = vxpose.xlu0.b32.cont [10/16] %v246, 128
    %295 = vxpose.xlu0.b32.cont [11/16] %v247, 128
    %296 = vxpose.xlu0.b32.cont [12/16] %v248, 128
    %297 = vxpose.xlu0.b32.cont [13/16] %v249, 128
    %298 = vxpose.xlu0.b32.cont [14/16] %v250, 128
    %299 = vxpose.xlu0.b32.cont [15/16] %v251, 128
    %300 = vxpose.xlu0.b32.end [16/16] %v252, 128
    %v301 = vpop.trf.xlu0
    %v302 = vpop.trf.xlu0
    %v303 = vpop.trf.xlu0
    %v304 = vpop.trf.xlu0
    %v305 = vpop.trf.xlu0
    %v306 = vpop.trf.xlu0
    %v307 = vpop.trf.xlu0
    %v308 = vpop.trf.xlu0
    %v309 = vpop.trf.xlu0
    %v310 = vpop.trf.xlu0
    %v311 = vpop.trf.xlu0
    %v312 = vpop.trf.xlu0
    %v313 = vpop.trf.xlu0
    %v314 = vpop.trf.xlu0
    %v315 = vpop.trf.xlu0
    %v316 = vpop.trf.xlu0
    %v317 = vadd.f32 %v269, %v270
    %v318 = vadd.f32 %v317, %v271
    %v319 = vadd.f32 %v318, %v272
    %v320 = vrot.slane %v319, 4
    %v321 = vadd.f32 %v319, %v320
    %v322 = vrot.slane %v321, 2
    %v323 = vadd.f32 %v321, %v322
    %v324 = vrot.slane %v323, 1
    %v325 = vadd.f32 %v323, %v324
    %v326 = vadd.f32 %v301, %v302
    %v327 = vadd.f32 %v326, %v303
    %v328 = vadd.f32 %v327, %v304
    %v329 = vrot.slane %v328, 4
    %v330 = vadd.f32 %v328, %v329
    %v331 = vrot.slane %v330, 2
    %v332 = vadd.f32 %v330, %v331
    %v333 = vrot.slane %v332, 1
    %v334 = vadd.f32 %v332, %v333
    %s335 = sld [smem:[#allocation2]]
    %v336 = vstv %s335
    %v337 = vadd.f32 %v325, %v336
    %v338 = vadd.f32 %v334, %v336
    %v339 = vand.u32 2147483647, %v337
    %v340 = vand.u32 2147483647, %v338
    %v341 = vmax.f32 %v339, 1e-12
    %v342 = vmax.f32 %v340, 1e-12
    %v343 = vrcp.pop %v341
    %v344 = vmul.f32 %v337, %v343
    %v345 = vrcp.pop %v342
    %v346 = vmul.f32 %v338, %v345
    %v349 = vcombine.low %v344, %v346
    %v351 = vunpack.c.l.s4 1966171168
    %v352 = vunpack.c.0.s8 %v351
    %v353 = vlaneseq
    %v354 = vshrl.u32 %v353, 7
    %v355 = vsub.s32 %v352, %v354
    %v356 = vrot.slane %v349, %v355
    %v358 = vunpack.c.l.s4 1966171168
    %v359 = vunpack.c.0.s8 %v358
    %v360 = vlaneseq
    %v361 = vshrl.u32 %v360, 7
    %v362 = vsub.s32 %v359, %v361
    %v363 = vrot.slane %v356, %v362
    %v365 = vlaneseq
    %vm366 = vcmp.ge.s32.totalorder %v365, 0
    %vm367 = vcmp.lt.s32.totalorder %v365, 256
    %vm368 = vmand %vm366, %vm367
    %369 = vst.msk [vmem:[#allocation3] sm:$0x3] %vm368, %v363
    // Predicated region
    $region18: #{ufd_min_discriminator.1} parent=1 // pred_check
      _
    $region19: #{ufd_min_discriminator.1} parent=1 // pred_check_branch
      %371 = sbr.rel (0) target = $region21
    $region20: #{ufd_min_discriminator.1} parent=1 // pred_region
      %s373 = ssub.s32 32, 32
      %374 = vsyncadd [#allocation4], %s373
      %s376 = sshll.u32 [#allocation3], 4
      %s377 = int_to_ptr.vmem [resolvable:$true] %s376
      %379 = dma.vmem_to_hbm [thread:$0]  %s377, 32, %s4, [#allocation4]
    $region21: #{ufd_min_discriminator.1} parent=1 // pred_fallthru
      _
    // Predicated region
    $region22: #{ufd_min_discriminator.1} parent=1 // pred_check
      _
    $region23: #{ufd_min_discriminator.1} parent=1 // pred_check_branch
      %381 = sbr.rel (0) target = $region25
    $region24: #{ufd_min_discriminator.1} parent=1 // pred_region
      %382 = dma.done [#allocation4], 32
    $region25: #{ufd_min_discriminator.1} parent=1 // pred_fallthru
      _
    %383 = vsyncpa [#allocation4], 1

</llo_original>
